<compile_context>
chip_gen: v7x
topology: tpu7x:2x2x1
jax: 0.10.0
libtpu: 0.0.40
codegen_flags: <defaults>
</compile_context>

<pallas_src>
import numpy as np
import jax
import jax.numpy as jnp
from jax.experimental import pallas as pl
from jax.experimental.pallas import tpu as pltpu


def _make_focal_ce_kernel(tile_n, num_classes, gamma, n_valid, padded_n):
    gamma = float(gamma)
    needs_mask = padded_n != n_valid

    def kernel(x_ref, t_ref, w_ref, out_ref):
        x = x_ref[...].astype(jnp.float32)      # (tile_n, C) logits
        t = t_ref[...]                           # (tile_n, 1) int32 class ids
        w = w_ref[...].astype(jnp.float32)       # (1, C) per-class weights

        # Numerically stable log-sum-exp over the class axis.
        m = jnp.max(x, axis=-1, keepdims=True)                       # (tile_n, 1)
        s = jnp.sum(jnp.exp(x - m), axis=-1, keepdims=True)          # EUP exp over tile
        lse = m + jnp.log(s)                                         # (tile_n, 1)

        # One-hot gather of x[i, target_i] and weight[target_i]
        # (VPU compare/select + lane reduce).
        cls = jax.lax.broadcasted_iota(jnp.int32, (tile_n, num_classes), 1)
        onehot = cls == t
        x_t = jnp.sum(jnp.where(onehot, x, 0.0), axis=-1, keepdims=True)
        w_t = jnp.sum(jnp.where(onehot, jnp.broadcast_to(w, onehot.shape), 0.0),
                      axis=-1, keepdims=True)

        # Weighted cross-entropy, reduction='none'.
        ce = w_t * (lse - x_t)                                        # (tile_n, 1)

        # Focal modulation (1 - exp(-ce))**gamma.
        if gamma == 0.0:
            focal = ce
        else:
            p = jnp.exp(-ce)
            omp = jnp.maximum(1.0 - p, 0.0)     # guard tiny negatives from roundoff
            if gamma.is_integer():
                mod = omp
                for _ in range(int(gamma) - 1):
                    mod = mod * omp             # integer gamma stays on the VPU
            else:
                # Non-integer gamma: omp**gamma = exp(gamma*log(omp)), 0 at omp==0.
                safe = jnp.maximum(omp, jnp.float32(1e-30))
                mod = jnp.where(omp > 0.0, jnp.exp(gamma * jnp.log(safe)), 0.0)
            focal = mod * ce

        if needs_mask:
            row = (pl.program_id(0) * tile_n
                   + jax.lax.broadcasted_iota(jnp.int32, (tile_n, 1), 0))
            focal = jnp.where(row < n_valid, focal, 0.0)

        # Each grid step owns its own output slot: no cross-step scalar
        # read-modify-write chain, and the grid axis is fully parallel.
        out_ref[0, 0] = jnp.sum(focal)

    return kernel


def focal_with_logits_third(logits, targets, *, weight=None, gamma=0.0, tile_n=512):
    """JAX/Pallas equivalent of FocalWithLogitsThird.forward(input, target).

    logits : (N, C) float array, targets : (N,) integer class indices,
    weight : optional (C,) per-class weights (as produced by calc_weights).
    """
    n, c = logits.shape

    # Large row tile (amortizes per-step overhead), never bigger than the
    # 8-aligned row count.
    tile_n = int(max(8, min(tile_n, pl.cdiv(n, 8) * 8)))
    padded_n = int(pl.cdiv(n, tile_n) * tile_n)
    grid = padded_n // tile_n

    x = logits.astype(jnp.float32)
    t = targets.astype(jnp.int32)
    if padded_n != n:
        x = jnp.pad(x, ((0, padded_n - n), (0, 0)))
        t = jnp.pad(t, ((0, padded_n - n),))
    t2d = t.reshape(padded_n, 1)

    if weight is None:
        w = jnp.ones((1, c), dtype=jnp.float32)
    else:
        w = jnp.asarray(weight, dtype=jnp.float32).reshape(1, c)

    kernel = _make_focal_ce_kernel(tile_n, c, gamma, n, padded_n)

    partials = pl.pallas_call(
        kernel,
        out_shape=jax.ShapeDtypeStruct((grid, 1), jnp.float32),
        grid_spec=pltpu.PrefetchScalarGridSpec(
            num_scalar_prefetch=0,
            grid=(grid,),
            in_specs=[
                pl.BlockSpec((tile_n, c), lambda i: (i, 0)),   # logits tile
                pl.BlockSpec((tile_n, 1), lambda i: (i, 0)),   # target ids tile
                pl.BlockSpec((1, c), lambda i: (0, 0)),        # class weights (resident)
            ],
            out_specs=pl.BlockSpec((1, 1), lambda i: (i, 0),
                                   memory_space=pltpu.SMEM),
        ),
        compiler_params=pltpu.CompilerParams(
            dimension_semantics=("parallel",),   # independent per-tile partials
        ),
    )(x, t2d, w)

    # Tiny final reduction + mean over the true (unpadded) N.
    return jnp.sum(partials) / jnp.float32(n)


# --- host-side helpers (match the PyTorch module) -------------------------

def calc_weights(cls_num_list, beta=0.9999):
    effective_num = 1.0 - np.power(beta, cls_num_list)
    per_cls_weights = (1.0 - beta) / np.array(effective_num)
    per_cls_weights = per_cls_weights / np.sum(per_cls_weights) * len(cls_num_list)
    return jnp.asarray(per_cls_weights, dtype=jnp.float32)


def focal_reference(logits, targets, weight=None, gamma=0.0):
    x = logits.astype(jnp.float32)
    logp = jax.nn.log_softmax(x, axis=-1)
    nll = -jnp.take_along_axis(logp, targets[:, None].astype(jnp.int32), axis=-1)[:, 0]
    if weight is not None:
        nll = weight[targets] * nll
    p = jnp.exp(-nll)
    return jnp.mean((1.0 - p) ** gamma * nll)


if __name__ == "__main__":
    key = jax.random.PRNGKey(0)
    k1, k2, k3, k4, k5 = jax.random.split(key, 5)

    # Small multi-class problem: N samples, C classes.
    N, C = 200, 16
    logits = jax.random.normal(k1, (N, C), dtype=jnp.float32) * 2.0
    targets = jax.random.randint(k2, (N,), 0, C, dtype=jnp.int32)

    # Class-balanced weights (calc_weights) + gamma = 2 focal term.
    cls_num_list = np.asarray(jax.random.randint(k3, (C,), 10, 1000))
    weight = calc_weights(cls_num_list)
    gamma = 2.0

    loss = jax.block_until_ready(
        focal_with_logits_third(logits, targets, weight=weight, gamma=gamma))
    ref = focal_reference(logits, targets, weight=weight, gamma=gamma)
    assert jnp.abs(loss - ref) < 1e-5 * (1.0 + jnp.abs(ref)), (loss, ref)

    # Default-constructor path: no class weights, gamma = 0 (plain mean CE).
    loss0 = jax.block_until_ready(
        focal_with_logits_third(logits, targets, weight=None, gamma=0.0))
    ref0 = focal_reference(logits, targets, weight=None, gamma=0.0)
    assert jnp.abs(loss0 - ref0) < 1e-5 * (1.0 + jnp.abs(ref0)), (loss0, ref0)

    # Non-tile-aligned N: exercises the large-tile + padding + mask path.
    N2 = 1037
    logits2 = jax.random.normal(k4, (N2, C), dtype=jnp.float32) * 2.0
    targets2 = jax.random.randint(k5, (N2,), 0, C, dtype=jnp.int32)
    loss2 = jax.block_until_ready(
        focal_with_logits_third(logits2, targets2, weight=weight, gamma=gamma))
    ref2 = focal_reference(logits2, targets2, weight=weight, gamma=gamma)
    assert jnp.abs(loss2 - ref2) < 1e-5 * (1.0 + jnp.abs(ref2)), (loss2, ref2)

    print("KERNEL_OK")
</pallas_src>

<mosaic_0001>
module attributes {stable_mosaic.version = 11 : i64} {
  func.func @kernel(%arg0: i32, %arg1: memref<200x16xf32, #tpu.memory_space<vmem>>, %arg2: memref<200x1xi32, #tpu.memory_space<vmem>>, %arg3: memref<1x16xf32, #tpu.memory_space<vmem>>, %arg4: memref<1x1xf32, #tpu.memory_space<smem>>) attributes {dimension_semantics = [#tpu.dimension_semantics<parallel>], iteration_bounds = array<i64: 1>, scalar_prefetch = 0 : i64, scratch_operands = 0 : i64, tpu.core_type = #tpu.core_type<tc>, window_params = [{transform_indices = @transform_0, window_bounds = array<i64: 200, 16>}, {transform_indices = @transform_1, window_bounds = array<i64: 200, 1>}, {pipeline_mode = #tpu.pipeline_mode<synchronous>, transform_indices = @transform_2, window_bounds = array<i64: 1, 16>}, {transform_indices = @transform_3, window_bounds = array<i64: 1, 1>}]} {
    %c0 = arith.constant 0 : index
    %c0_0 = arith.constant 0 : index
    %0 = vector.load %arg1[%c0, %c0_0] : memref<200x16xf32, #tpu.memory_space<vmem>>, vector<200x16xf32>
    %c0_1 = arith.constant 0 : index
    %c0_2 = arith.constant 0 : index
    %1 = vector.load %arg2[%c0_1, %c0_2] : memref<200x1xi32, #tpu.memory_space<vmem>>, vector<200x1xi32>
    %c0_3 = arith.constant 0 : index
    %c0_4 = arith.constant 0 : index
    %2 = vector.load %arg3[%c0_3, %c0_4] : memref<1x16xf32, #tpu.memory_space<vmem>>, vector<1x16xf32>
    %cst = arith.constant dense<0xFF800000> : vector<200xf32>
    %3 = vector.multi_reduction <maximumf>, %0, %cst [1] : vector<200x16xf32> to vector<200xf32>
    %4 = vector.shape_cast %3 : vector<200xf32> to vector<200x1xf32>
    %5 = vector.broadcast %4 : vector<200x1xf32> to vector<200x16xf32>
    %6 = arith.subf %0, %5 : vector<200x16xf32>
    %7 = math.exp %6 : vector<200x16xf32>
    %cst_5 = arith.constant dense<0.000000e+00> : vector<200xf32>
    %8 = vector.multi_reduction <add>, %7, %cst_5 [1] : vector<200x16xf32> to vector<200xf32>
    %9 = vector.shape_cast %8 : vector<200xf32> to vector<200x1xf32>
    %10 = math.log %9 : vector<200x1xf32>
    %11 = arith.addf %4, %10 : vector<200x1xf32>
    %12 = tpu.iota {dimensions = array<i32: 1>} : vector<200x16xi32>
    %13 = vector.broadcast %1 : vector<200x1xi32> to vector<200x16xi32>
    %14 = arith.cmpi eq, %12, %13 : vector<200x16xi32>
    %cst_6 = arith.constant 0.000000e+00 : f32
    %15 = vector.broadcast %cst_6 : f32 to vector<200x16xf32>
    %16 = arith.select %14, %0, %15 : vector<200x16xi1>, vector<200x16xf32>
    %cst_7 = arith.constant dense<0.000000e+00> : vector<200xf32>
    %17 = vector.multi_reduction <add>, %16, %cst_7 [1] : vector<200x16xf32> to vector<200xf32>
    %18 = vector.shape_cast %17 : vector<200xf32> to vector<200x1xf32>
    %19 = vector.shape_cast %2 : vector<1x16xf32> to vector<1x16xf32>
    %20 = vector.broadcast %19 : vector<1x16xf32> to vector<200x16xf32>
    %cst_8 = arith.constant 0.000000e+00 : f32
    %21 = vector.broadcast %cst_8 : f32 to vector<200x16xf32>
    %22 = arith.select %14, %20, %21 : vector<200x16xi1>, vector<200x16xf32>
    %cst_9 = arith.constant dense<0.000000e+00> : vector<200xf32>
    %23 = vector.multi_reduction <add>, %22, %cst_9 [1] : vector<200x16xf32> to vector<200xf32>
    %24 = vector.shape_cast %23 : vector<200xf32> to vector<200x1xf32>
    %25 = arith.subf %11, %18 : vector<200x1xf32>
    %26 = arith.mulf %24, %25 : vector<200x1xf32>
    %cst_10 = arith.constant 0.000000e+00 : f32
    %27 = vector.broadcast %cst_10 : f32 to vector<200x1xf32>
    %28 = arith.subf %27, %26 : vector<200x1xf32>
    %29 = math.exp %28 : vector<200x1xf32>
    %cst_11 = arith.constant 1.000000e+00 : f32
    %30 = vector.broadcast %cst_11 : f32 to vector<200x1xf32>
    %31 = arith.subf %30, %29 : vector<200x1xf32>
    %cst_12 = arith.constant 0.000000e+00 : f32
    %32 = vector.broadcast %cst_12 : f32 to vector<200x1xf32>
    %33 = arith.maximumf %31, %32 : vector<200x1xf32>
    %34 = arith.mulf %33, %33 : vector<200x1xf32>
    %35 = arith.mulf %34, %26 : vector<200x1xf32>
    %36 = vector.shape_cast %35 : vector<200x1xf32> to vector<1x200x1xf32>
    %cst_13 = arith.constant dense<0.000000e+00> : vector<1xf32>
    %37 = vector.multi_reduction <add>, %36, %cst_13 [1, 2] : vector<1x200x1xf32> to vector<1xf32>
    %38 = vector.shape_cast %37 : vector<1xf32> to vector<1x1x1xf32>
    %39 = vector.extract %38[0, 0, 0] : f32 from vector<1x1x1xf32>
    %c0_14 = arith.constant 0 : index
    %c0_15 = arith.constant 0 : index
    %40 = memref.load %arg4[%c0_14, %c0_15] : memref<1x1xf32, #tpu.memory_space<smem>>
    memref.store %39, %arg4[%c0_14, %c0_15] : memref<1x1xf32, #tpu.memory_space<smem>>
    return
  }
  func.func @transform_0(%arg0: i32) -> (i32, i32) {
    %c0_i32 = arith.constant 0 : i32
    %c0_i32_0 = arith.constant 0 : i32
    return %arg0, %c0_i32 : i32, i32
  }
  func.func @transform_1(%arg0: i32) -> (i32, i32) {
    %c0_i32 = arith.constant 0 : i32
    %c0_i32_0 = arith.constant 0 : i32
    return %arg0, %c0_i32 : i32, i32
  }
  func.func @transform_2(%arg0: i32) -> (i32, i32) {
    %c0_i32 = arith.constant 0 : i32
    %c0_i32_0 = arith.constant 0 : i32
    %c0_i32_1 = arith.constant 0 : i32
    return %c0_i32, %c0_i32_0 : i32, i32
  }
  func.func @transform_3(%arg0: i32) -> (i32, i32) {
    %c0_i32 = arith.constant 0 : i32
    %c0_i32_0 = arith.constant 0 : i32
    return %arg0, %c0_i32 : i32, i32
  }
}

</mosaic_0001>

<llo_original>
// kernel: tpu_custom_call.1
$region0: #{tpu_custom_call.1}
  #allocation0 [shape = 'u32[]', space=smem, size = 0x4, offset = 0x4, fixed_abs, tag = 'smem constant byte address 0x4 - core index']
  #allocation1 [shape = 'u32[144,128]{1,0:T(1,128)}', space=vmem, size = 0x12000, scoped, tag = 'internal scratch']
  %s0 = inlined_call_operand.vmem [shape: f32[200,16], index: 0, kind: input, shape index: {}]
  %s1 = inlined_call_operand.vmem [shape: s32[200,1], index: 1, kind: input, shape index: {}]
  %s2 = inlined_call_operand.vmem [shape: f32[1,16], index: 2, kind: input, shape index: {}]
  %s3 = inlined_call_operand.hbm [shape: f32[1,1], index: 3, kind: output, shape index: {}]
  %s4 = sld [smem:[#allocation0]]
  $region22: #{tpu_custom_call.1} parent=0
    _
  %s6 = ssub.s32 1, %s4
  %s7 = scalar_select 0, %s6, %s4
  $region1: #{tpu_custom_call.1} parent=0
    #allocation2 [shape = 'u8[512]{0}', space=smem, size = 0x200, scoped, tag = 'output window, operand 0, single buffered']
    #allocation3 [shape = 's32[1]{0}', space=sflag, size = 0x4, scoped, tag = 'scoped memory for tpu_custom_call.1']
    %8 = vsyncpa [#allocation3], 0
    // Predicated region
    $region2: #{tpu_custom_call.1} parent=1 // pred_check
      _
    $region3: #{tpu_custom_call.1} parent=1 // pred_check_branch
      %10 = sbr.rel (0) target = $region5
    $region4: #{tpu_custom_call.1} parent=1 // pred_region
      _
    $region5: #{tpu_custom_call.1} parent=1 // pred_fallthru
      _
    // Predicated region
    $region6: #{tpu_custom_call.1} parent=1 // pred_check
      _
    $region7: #{tpu_custom_call.1} parent=1 // pred_check_branch
      %12 = sbr.rel (0) target = $region9
    $region8: #{tpu_custom_call.1} parent=1 // pred_region
      _
    $region9: #{tpu_custom_call.1} parent=1 // pred_fallthru
      _
    // Predicated region
    $region10: #{tpu_custom_call.1} parent=1 // pred_check
      _
    $region11: #{tpu_custom_call.1} parent=1 // pred_check_branch
      %14 = sbr.rel (0) target = $region13
    $region12: #{tpu_custom_call.1} parent=1 // pred_region
      _
    $region13: #{tpu_custom_call.1} parent=1 // pred_fallthru
      _
    %v15 = vld [vmem:[%s0] sm:$0xff]
    %v16 = vld [vmem:[%s0 + $0x8] sm:$0xff]
    %v17 = vld [vmem:[%s0 + $0x10] sm:$0xff]
    %v18 = vld [vmem:[%s0 + $0x18] sm:$0xff]
    %v19 = vld [vmem:[%s0 + $0x20] sm:$0xff]
    %v20 = vld [vmem:[%s0 + $0x28] sm:$0xff]
    %v21 = vld [vmem:[%s0 + $0x30] sm:$0xff]
    %v22 = vld [vmem:[%s0 + $0x38] sm:$0xff]
    %v23 = vld [vmem:[%s0 + $0x40] sm:$0xff]
    %v24 = vld [vmem:[%s0 + $0x48] sm:$0xff]
    %v25 = vld [vmem:[%s0 + $0x50] sm:$0xff]
    %v26 = vld [vmem:[%s0 + $0x58] sm:$0xff]
    %v27 = vld [vmem:[%s0 + $0x60] sm:$0xff]
    %v28 = vld [vmem:[%s0 + $0x68] sm:$0xff]
    %v29 = vld [vmem:[%s0 + $0x70] sm:$0xff]
    %v30 = vld [vmem:[%s0 + $0x78] sm:$0xff]
    %v31 = vld [vmem:[%s0 + $0x80] sm:$0xff]
    %v32 = vld [vmem:[%s0 + $0x88] sm:$0xff]
    %v33 = vld [vmem:[%s0 + $0x90] sm:$0xff]
    %v34 = vld [vmem:[%s0 + $0x98] sm:$0xff]
    %v35 = vld [vmem:[%s0 + $0xa0] sm:$0xff]
    %v36 = vld [vmem:[%s0 + $0xa8] sm:$0xff]
    %v37 = vld [vmem:[%s0 + $0xb0] sm:$0xff]
    %v38 = vld [vmem:[%s0 + $0xb8] sm:$0xff]
    %v39 = vld [vmem:[%s0 + $0xc0] sm:$0xff]
    %v40 = vld [vmem:[%s1] sm:$0xff]
    %v41 = vld [vmem:[%s1 + $0x8] sm:$0xff]
    %v42 = vld [vmem:[%s1 + $0x10] sm:$0xff]
    %v43 = vld [vmem:[%s1 + $0x18] sm:$0xff]
    %v44 = vld [vmem:[%s1 + $0x20] sm:$0xff]
    %v45 = vld [vmem:[%s1 + $0x28] sm:$0xff]
    %v46 = vld [vmem:[%s1 + $0x30] sm:$0xff]
    %v47 = vld [vmem:[%s1 + $0x38] sm:$0xff]
    %v48 = vld [vmem:[%s1 + $0x40] sm:$0xff]
    %v49 = vld [vmem:[%s1 + $0x48] sm:$0xff]
    %v50 = vld [vmem:[%s1 + $0x50] sm:$0xff]
    %v51 = vld [vmem:[%s1 + $0x58] sm:$0xff]
    %v52 = vld [vmem:[%s1 + $0x60] sm:$0xff]
    %v53 = vld [vmem:[%s1 + $0x68] sm:$0xff]
    %v54 = vld [vmem:[%s1 + $0x70] sm:$0xff]
    %v55 = vld [vmem:[%s1 + $0x78] sm:$0xff]
    %v56 = vld [vmem:[%s1 + $0x80] sm:$0xff]
    %v57 = vld [vmem:[%s1 + $0x88] sm:$0xff]
    %v58 = vld [vmem:[%s1 + $0x90] sm:$0xff]
    %v59 = vld [vmem:[%s1 + $0x98] sm:$0xff]
    %v60 = vld [vmem:[%s1 + $0xa0] sm:$0xff]
    %v61 = vld [vmem:[%s1 + $0xa8] sm:$0xff]
    %v62 = vld [vmem:[%s1 + $0xb0] sm:$0xff]
    %v63 = vld [vmem:[%s1 + $0xb8] sm:$0xff]
    %v64 = vld [vmem:[%s1 + $0xc0] sm:$0xff]
    %v65 = vld [vmem:[%s2] sm:$0x1]
    %vm66 = vcmask 130048
    %v67 = vsel %vm66, %v15, -inf
    %68 = vmax.xlane.f32.xlu0 %v67
    %v69 = vpop.xlane.xlu0 %68
    %v70 = vsel %vm66, %v16, -inf
    %71 = vmax.xlane.f32.xlu0 %v70
    %v72 = vpop.xlane.xlu0 %71
    %v73 = vsel %vm66, %v17, -inf
    %74 = vmax.xlane.f32.xlu0 %v73
    %v75 = vpop.xlane.xlu0 %74
    %v76 = vsel %vm66, %v18, -inf
    %77 = vmax.xlane.f32.xlu0 %v76
    %v78 = vpop.xlane.xlu0 %77
    %v79 = vsel %vm66, %v19, -inf
    %80 = vmax.xlane.f32.xlu0 %v79
    %v81 = vpop.xlane.xlu0 %80
    %v82 = vsel %vm66, %v20, -inf
    %83 = vmax.xlane.f32.xlu0 %v82
    %v84 = vpop.xlane.xlu0 %83
    %v85 = vsel %vm66, %v21, -inf
    %86 = vmax.xlane.f32.xlu0 %v85
    %v87 = vpop.xlane.xlu0 %86
    %v88 = vsel %vm66, %v22, -inf
    %89 = vmax.xlane.f32.xlu0 %v88
    %v90 = vpop.xlane.xlu0 %89
    %v91 = vsel %vm66, %v23, -inf
    %92 = vmax.xlane.f32.xlu0 %v91
    %v93 = vpop.xlane.xlu0 %92
    %v94 = vsel %vm66, %v24, -inf
    %95 = vmax.xlane.f32.xlu0 %v94
    %v96 = vpop.xlane.xlu0 %95
    %v97 = vsel %vm66, %v25, -inf
    %98 = vmax.xlane.f32.xlu0 %v97
    %v99 = vpop.xlane.xlu0 %98
    %v100 = vsel %vm66, %v26, -inf
    %101 = vmax.xlane.f32.xlu0 %v100
    %v102 = vpop.xlane.xlu0 %101
    %v103 = vsel %vm66, %v27, -inf
    %104 = vmax.xlane.f32.xlu0 %v103
    %v105 = vpop.xlane.xlu0 %104
    %v106 = vsel %vm66, %v28, -inf
    %107 = vmax.xlane.f32.xlu0 %v106
    %v108 = vpop.xlane.xlu0 %107
    %v109 = vsel %vm66, %v29, -inf
    %110 = vmax.xlane.f32.xlu0 %v109
    %v111 = vpop.xlane.xlu0 %110
    %v112 = vsel %vm66, %v30, -inf
    %113 = vmax.xlane.f32.xlu0 %v112
    %v114 = vpop.xlane.xlu0 %113
    %v115 = vsel %vm66, %v31, -inf
    %116 = vmax.xlane.f32.xlu0 %v115
    %v117 = vpop.xlane.xlu0 %116
    %v118 = vsel %vm66, %v32, -inf
    %119 = vmax.xlane.f32.xlu0 %v118
    %v120 = vpop.xlane.xlu0 %119
    %v121 = vsel %vm66, %v33, -inf
    %122 = vmax.xlane.f32.xlu0 %v121
    %v123 = vpop.xlane.xlu0 %122
    %v124 = vsel %vm66, %v34, -inf
    %125 = vmax.xlane.f32.xlu0 %v124
    %v126 = vpop.xlane.xlu0 %125
    %v127 = vsel %vm66, %v35, -inf
    %128 = vmax.xlane.f32.xlu0 %v127
    %v129 = vpop.xlane.xlu0 %128
    %v130 = vsel %vm66, %v36, -inf
    %131 = vmax.xlane.f32.xlu0 %v130
    %v132 = vpop.xlane.xlu0 %131
    %v133 = vsel %vm66, %v37, -inf
    %134 = vmax.xlane.f32.xlu0 %v133
    %v135 = vpop.xlane.xlu0 %134
    %v136 = vsel %vm66, %v38, -inf
    %137 = vmax.xlane.f32.xlu0 %v136
    %v138 = vpop.xlane.xlu0 %137
    %v139 = vsel %vm66, %v39, -inf
    %140 = vmax.xlane.f32.xlu0 %v139
    %v141 = vpop.xlane.xlu0 %140
    %v142 = vsub.f32 %v15, %v69
    %v143 = vsub.f32 %v16, %v72
    %v144 = vsub.f32 %v17, %v75
    %v145 = vsub.f32 %v18, %v78
    %v146 = vsub.f32 %v19, %v81
    %v147 = vsub.f32 %v20, %v84
    %v148 = vsub.f32 %v21, %v87
    %v149 = vsub.f32 %v22, %v90
    %v150 = vsub.f32 %v23, %v93
    %v151 = vsub.f32 %v24, %v96
    %v152 = vsub.f32 %v25, %v99
    %v153 = vsub.f32 %v26, %v102
    %v154 = vsub.f32 %v27, %v105
    %v155 = vsub.f32 %v28, %v108
    %v156 = vsub.f32 %v29, %v111
    %v157 = vsub.f32 %v30, %v114
    %v158 = vsub.f32 %v31, %v117
    %v159 = vsub.f32 %v32, %v120
    %v160 = vsub.f32 %v33, %v123
    %v161 = vsub.f32 %v34, %v126
    %v162 = vsub.f32 %v35, %v129
    %v163 = vsub.f32 %v36, %v132
    %v164 = vsub.f32 %v37, %v135
    %v165 = vsub.f32 %v38, %v138
    %v166 = vsub.f32 %v39, %v141
    %v167 = vmul.f32 %v142, 1.442695
    %v168 = vpow.pop %v167
    %v169 = vmul.f32 %v143, 1.442695
    %v170 = vpow.pop %v169
    %v171 = vmul.f32 %v144, 1.442695
    %v172 = vpow.pop %v171
    %v173 = vmul.f32 %v145, 1.442695
    %v174 = vpow.pop %v173
    %v175 = vmul.f32 %v146, 1.442695
    %v176 = vpow.pop %v175
    %v177 = vmul.f32 %v147, 1.442695
    %v178 = vpow.pop %v177
    %v179 = vmul.f32 %v148, 1.442695
    %v180 = vpow.pop %v179
    %v181 = vmul.f32 %v149, 1.442695
    %v182 = vpow.pop %v181
    %v183 = vmul.f32 %v150, 1.442695
    %v184 = vpow.pop %v183
    %v185 = vmul.f32 %v151, 1.442695
    %v186 = vpow.pop %v185
    %v187 = vmul.f32 %v152, 1.442695
    %v188 = vpow.pop %v187
    %v189 = vmul.f32 %v153, 1.442695
    %v190 = vpow.pop %v189
    %v191 = vmul.f32 %v154, 1.442695
    %v192 = vpow.pop %v191
    %v193 = vmul.f32 %v155, 1.442695
    %v194 = vpow.pop %v193
    %v195 = vmul.f32 %v156, 1.442695
    %v196 = vpow.pop %v195
    %v197 = vmul.f32 %v157, 1.442695
    %v198 = vpow.pop %v197
    %v199 = vmul.f32 %v158, 1.442695
    %v200 = vpow.pop %v199
    %v201 = vmul.f32 %v159, 1.442695
    %v202 = vpow.pop %v201
    %v203 = vmul.f32 %v160, 1.442695
    %v204 = vpow.pop %v203
    %v205 = vmul.f32 %v161, 1.442695
    %v206 = vpow.pop %v205
    %v207 = vmul.f32 %v162, 1.442695
    %v208 = vpow.pop %v207
    %v209 = vmul.f32 %v163, 1.442695
    %v210 = vpow.pop %v209
    %v211 = vmul.f32 %v164, 1.442695
    %v212 = vpow.pop %v211
    %v213 = vmul.f32 %v165, 1.442695
    %v214 = vpow.pop %v213
    %v215 = vmul.f32 %v166, 1.442695
    %v216 = vpow.pop %v215
    %v217 = vsel %vm66, %v168, 0.0
    %218 = vadd.xlane.f32.xlu0 %v217
    %v219 = vpop.xlane.xlu0 %218
    %v220 = vsel %vm66, %v170, 0.0
    %221 = vadd.xlane.f32.xlu0 %v220
    %v222 = vpop.xlane.xlu0 %221
    %v223 = vsel %vm66, %v172, 0.0
    %224 = vadd.xlane.f32.xlu0 %v223
    %v225 = vpop.xlane.xlu0 %224
    %v226 = vsel %vm66, %v174, 0.0
    %227 = vadd.xlane.f32.xlu0 %v226
    %v228 = vpop.xlane.xlu0 %227
    %v229 = vsel %vm66, %v176, 0.0
    %230 = vadd.xlane.f32.xlu0 %v229
    %v231 = vpop.xlane.xlu0 %230
    %v232 = vsel %vm66, %v178, 0.0
    %233 = vadd.xlane.f32.xlu0 %v232
    %v234 = vpop.xlane.xlu0 %233
    %v235 = vsel %vm66, %v180, 0.0
    %236 = vadd.xlane.f32.xlu0 %v235
    %v237 = vpop.xlane.xlu0 %236
    %v238 = vsel %vm66, %v182, 0.0
    %239 = vadd.xlane.f32.xlu0 %v238
    %v240 = vpop.xlane.xlu0 %239
    %v241 = vsel %vm66, %v184, 0.0
    %242 = vadd.xlane.f32.xlu0 %v241
    %v243 = vpop.xlane.xlu0 %242
    %v244 = vsel %vm66, %v186, 0.0
    %245 = vadd.xlane.f32.xlu0 %v244
    %v246 = vpop.xlane.xlu0 %245
    %v247 = vsel %vm66, %v188, 0.0
    %248 = vadd.xlane.f32.xlu0 %v247
    %v249 = vpop.xlane.xlu0 %248
    %v250 = vsel %vm66, %v190, 0.0
    %251 = vadd.xlane.f32.xlu0 %v250
    %v252 = vpop.xlane.xlu0 %251
    %v253 = vsel %vm66, %v192, 0.0
    %254 = vadd.xlane.f32.xlu0 %v253
    %v255 = vpop.xlane.xlu0 %254
    %v256 = vsel %vm66, %v194, 0.0
    %257 = vadd.xlane.f32.xlu0 %v256
    %v258 = vpop.xlane.xlu0 %257
    %v259 = vsel %vm66, %v196, 0.0
    %260 = vadd.xlane.f32.xlu0 %v259
    %v261 = vpop.xlane.xlu0 %260
    %v262 = vsel %vm66, %v198, 0.0
    %263 = vadd.xlane.f32.xlu0 %v262
    %v264 = vpop.xlane.xlu0 %263
    %v265 = vsel %vm66, %v200, 0.0
    %266 = vadd.xlane.f32.xlu0 %v265
    %v267 = vpop.xlane.xlu0 %266
    %v268 = vsel %vm66, %v202, 0.0
    %269 = vadd.xlane.f32.xlu0 %v268
    %v270 = vpop.xlane.xlu0 %269
    %v271 = vsel %vm66, %v204, 0.0
    %272 = vadd.xlane.f32.xlu0 %v271
    %v273 = vpop.xlane.xlu0 %272
    %v274 = vsel %vm66, %v206, 0.0
    %275 = vadd.xlane.f32.xlu0 %v274
    %v276 = vpop.xlane.xlu0 %275
    %v277 = vsel %vm66, %v208, 0.0
    %278 = vadd.xlane.f32.xlu0 %v277
    %v279 = vpop.xlane.xlu0 %278
    %v280 = vsel %vm66, %v210, 0.0
    %281 = vadd.xlane.f32.xlu0 %v280
    %v282 = vpop.xlane.xlu0 %281
    %v283 = vsel %vm66, %v212, 0.0
    %284 = vadd.xlane.f32.xlu0 %v283
    %v285 = vpop.xlane.xlu0 %284
    %v286 = vsel %vm66, %v214, 0.0
    %287 = vadd.xlane.f32.xlu0 %v286
    %v288 = vpop.xlane.xlu0 %287
    %v289 = vsel %vm66, %v216, 0.0
    %290 = vadd.xlane.f32.xlu0 %v289
    %v291 = vpop.xlane.xlu0 %290
    %v292 = vlog2.pop %v219
    %v293 = vmul.f32 %v292, 0.6931472
    %v294 = vlog2.pop %v222
    %v295 = vmul.f32 %v294, 0.6931472
    %v296 = vlog2.pop %v225
    %v297 = vmul.f32 %v296, 0.6931472
    %v298 = vlog2.pop %v228
    %v299 = vmul.f32 %v298, 0.6931472
    %v300 = vlog2.pop %v231
    %v301 = vmul.f32 %v300, 0.6931472
    %v302 = vlog2.pop %v234
    %v303 = vmul.f32 %v302, 0.6931472
    %v304 = vlog2.pop %v237
    %v305 = vmul.f32 %v304, 0.6931472
    %v306 = vlog2.pop %v240
    %v307 = vmul.f32 %v306, 0.6931472
    %v308 = vlog2.pop %v243
    %v309 = vmul.f32 %v308, 0.6931472
    %v310 = vlog2.pop %v246
    %v311 = vmul.f32 %v310, 0.6931472
    %v312 = vlog2.pop %v249
    %v313 = vmul.f32 %v312, 0.6931472
    %v314 = vlog2.pop %v252
    %v315 = vmul.f32 %v314, 0.6931472
    %v316 = vlog2.pop %v255
    %v317 = vmul.f32 %v316, 0.6931472
    %v318 = vlog2.pop %v258
    %v319 = vmul.f32 %v318, 0.6931472
    %v320 = vlog2.pop %v261
    %v321 = vmul.f32 %v320, 0.6931472
    %v322 = vlog2.pop %v264
    %v323 = vmul.f32 %v322, 0.6931472
    %v324 = vlog2.pop %v267
    %v325 = vmul.f32 %v324, 0.6931472
    %v326 = vlog2.pop %v270
    %v327 = vmul.f32 %v326, 0.6931472
    %v328 = vlog2.pop %v273
    %v329 = vmul.f32 %v328, 0.6931472
    %v330 = vlog2.pop %v276
    %v331 = vmul.f32 %v330, 0.6931472
    %v332 = vlog2.pop %v279
    %v333 = vmul.f32 %v332, 0.6931472
    %v334 = vlog2.pop %v282
    %v335 = vmul.f32 %v334, 0.6931472
    %v336 = vlog2.pop %v285
    %v337 = vmul.f32 %v336, 0.6931472
    %v338 = vlog2.pop %v288
    %v339 = vmul.f32 %v338, 0.6931472
    %v340 = vlog2.pop %v291
    %v341 = vmul.f32 %v340, 0.6931472
    %v342 = vadd.f32 %v69, %v293
    %v343 = vadd.f32 %v72, %v295
    %v344 = vadd.f32 %v75, %v297
    %v345 = vadd.f32 %v78, %v299
    %v346 = vadd.f32 %v81, %v301
    %v347 = vadd.f32 %v84, %v303
    %v348 = vadd.f32 %v87, %v305
    %v349 = vadd.f32 %v90, %v307
    %v350 = vadd.f32 %v93, %v309
    %v351 = vadd.f32 %v96, %v311
    %v352 = vadd.f32 %v99, %v313
    %v353 = vadd.f32 %v102, %v315
    %v354 = vadd.f32 %v105, %v317
    %v355 = vadd.f32 %v108, %v319
    %v356 = vadd.f32 %v111, %v321
    %v357 = vadd.f32 %v114, %v323
    %v358 = vadd.f32 %v117, %v325
    %v359 = vadd.f32 %v120, %v327
    %v360 = vadd.f32 %v123, %v329
    %v361 = vadd.f32 %v126, %v331
    %v362 = vadd.f32 %v129, %v333
    %v363 = vadd.f32 %v132, %v335
    %v364 = vadd.f32 %v135, %v337
    %v365 = vadd.f32 %v138, %v339
    %v366 = vadd.f32 %v141, %v341
    %v367 = vlaneseq
    %v368 = vand.u32 %v367, 127
    %369 = vset.pattern.permute.xlu0 0
    %370 = vperm.xlu0 %369, %v40
    %v371 = vpop.permute.xlu0 %370
    %372 = vset.pattern.permute.xlu0 0
    %373 = vperm.xlu0 %372, %v41
    %v374 = vpop.permute.xlu0 %373
    %375 = vset.pattern.permute.xlu0 0
    %376 = vperm.xlu0 %375, %v42
    %v377 = vpop.permute.xlu0 %376
    %378 = vset.pattern.permute.xlu0 0
    %379 = vperm.xlu0 %378, %v43
    %v380 = vpop.permute.xlu0 %379
    %381 = vset.pattern.permute.xlu0 0
    %382 = vperm.xlu0 %381, %v44
    %v383 = vpop.permute.xlu0 %382
    %384 = vset.pattern.permute.xlu0 0
    %385 = vperm.xlu0 %384, %v45
    %v386 = vpop.permute.xlu0 %385
    %387 = vset.pattern.permute.xlu0 0
    %388 = vperm.xlu0 %387, %v46
    %v389 = vpop.permute.xlu0 %388
    %390 = vset.pattern.permute.xlu0 0
    %391 = vperm.xlu0 %390, %v47
    %v392 = vpop.permute.xlu0 %391
    %393 = vset.pattern.permute.xlu0 0
    %394 = vperm.xlu0 %393, %v48
    %v395 = vpop.permute.xlu0 %394
    %396 = vset.pattern.permute.xlu0 0
    %397 = vperm.xlu0 %396, %v49
    %v398 = vpop.permute.xlu0 %397
    %399 = vset.pattern.permute.xlu0 0
    %400 = vperm.xlu0 %399, %v50
    %v401 = vpop.permute.xlu0 %400
    %402 = vset.pattern.permute.xlu0 0
    %403 = vperm.xlu0 %402, %v51
    %v404 = vpop.permute.xlu0 %403
    %405 = vset.pattern.permute.xlu0 0
    %406 = vperm.xlu0 %405, %v52
    %v407 = vpop.permute.xlu0 %406
    %408 = vset.pattern.permute.xlu0 0
    %409 = vperm.xlu0 %408, %v53
    %v410 = vpop.permute.xlu0 %409
    %411 = vset.pattern.permute.xlu0 0
    %412 = vperm.xlu0 %411, %v54
    %v413 = vpop.permute.xlu0 %412
    %414 = vset.pattern.permute.xlu0 0
    %415 = vperm.xlu0 %414, %v55
    %v416 = vpop.permute.xlu0 %415
    %417 = vset.pattern.permute.xlu0 0
    %418 = vperm.xlu0 %417, %v56
    %v419 = vpop.permute.xlu0 %418
    %420 = vset.pattern.permute.xlu0 0
    %421 = vperm.xlu0 %420, %v57
    %v422 = vpop.permute.xlu0 %421
    %423 = vset.pattern.permute.xlu0 0
    %424 = vperm.xlu0 %423, %v58
    %v425 = vpop.permute.xlu0 %424
    %426 = vset.pattern.permute.xlu0 0
    %427 = vperm.xlu0 %426, %v59
    %v428 = vpop.permute.xlu0 %427
    %429 = vset.pattern.permute.xlu0 0
    %430 = vperm.xlu0 %429, %v60
    %v431 = vpop.permute.xlu0 %430
    %432 = vset.pattern.permute.xlu0 0
    %433 = vperm.xlu0 %432, %v61
    %v434 = vpop.permute.xlu0 %433
    %435 = vset.pattern.permute.xlu0 0
    %436 = vperm.xlu0 %435, %v62
    %v437 = vpop.permute.xlu0 %436
    %438 = vset.pattern.permute.xlu0 0
    %439 = vperm.xlu0 %438, %v63
    %v440 = vpop.permute.xlu0 %439
    %441 = vset.pattern.permute.xlu0 0
    %442 = vperm.xlu0 %441, %v64
    %v443 = vpop.permute.xlu0 %442
    %vm444 = vcmp.eq.s32.totalorder %v368, %v371
    %vm445 = vcmp.eq.s32.totalorder %v368, %v374
    %vm446 = vcmp.eq.s32.totalorder %v368, %v377
    %vm447 = vcmp.eq.s32.totalorder %v368, %v380
    %vm448 = vcmp.eq.s32.totalorder %v368, %v383
    %vm449 = vcmp.eq.s32.totalorder %v368, %v386
    %vm450 = vcmp.eq.s32.totalorder %v368, %v389
    %vm451 = vcmp.eq.s32.totalorder %v368, %v392
    %vm452 = vcmp.eq.s32.totalorder %v368, %v395
    %vm453 = vcmp.eq.s32.totalorder %v368, %v398
    %vm454 = vcmp.eq.s32.totalorder %v368, %v401
    %vm455 = vcmp.eq.s32.totalorder %v368, %v404
    %vm456 = vcmp.eq.s32.totalorder %v368, %v407
    %vm457 = vcmp.eq.s32.totalorder %v368, %v410
    %vm458 = vcmp.eq.s32.totalorder %v368, %v413
    %vm459 = vcmp.eq.s32.totalorder %v368, %v416
    %vm460 = vcmp.eq.s32.totalorder %v368, %v419
    %vm461 = vcmp.eq.s32.totalorder %v368, %v422
    %vm462 = vcmp.eq.s32.totalorder %v368, %v425
    %vm463 = vcmp.eq.s32.totalorder %v368, %v428
    %vm464 = vcmp.eq.s32.totalorder %v368, %v431
    %vm465 = vcmp.eq.s32.totalorder %v368, %v434
    %vm466 = vcmp.eq.s32.totalorder %v368, %v437
    %vm467 = vcmp.eq.s32.totalorder %v368, %v440
    %vm468 = vcmp.eq.s32.totalorder %v368, %v443
    %v469 = vsel %vm444, %v15, 0.0
    %v470 = vsel %vm445, %v16, 0.0
    %v471 = vsel %vm446, %v17, 0.0
    %v472 = vsel %vm447, %v18, 0.0
    %v473 = vsel %vm448, %v19, 0.0
    %v474 = vsel %vm449, %v20, 0.0
    %v475 = vsel %vm450, %v21, 0.0
    %v476 = vsel %vm451, %v22, 0.0
    %v477 = vsel %vm452, %v23, 0.0
    %v478 = vsel %vm453, %v24, 0.0
    %v479 = vsel %vm454, %v25, 0.0
    %v480 = vsel %vm455, %v26, 0.0
    %v481 = vsel %vm456, %v27, 0.0
    %v482 = vsel %vm457, %v28, 0.0
    %v483 = vsel %vm458, %v29, 0.0
    %v484 = vsel %vm459, %v30, 0.0
    %v485 = vsel %vm460, %v31, 0.0
    %v486 = vsel %vm461, %v32, 0.0
    %v487 = vsel %vm462, %v33, 0.0
    %v488 = vsel %vm463, %v34, 0.0
    %v489 = vsel %vm464, %v35, 0.0
    %v490 = vsel %vm465, %v36, 0.0
    %v491 = vsel %vm466, %v37, 0.0
    %v492 = vsel %vm467, %v38, 0.0
    %v493 = vsel %vm468, %v39, 0.0
    %v494 = vsel %vm66, %v469, 0.0
    %495 = vadd.xlane.f32.xlu0 %v494
    %v496 = vpop.xlane.xlu0 %495
    %v497 = vsel %vm66, %v470, 0.0
    %498 = vadd.xlane.f32.xlu0 %v497
    %v499 = vpop.xlane.xlu0 %498
    %v500 = vsel %vm66, %v471, 0.0
    %501 = vadd.xlane.f32.xlu0 %v500
    %v502 = vpop.xlane.xlu0 %501
    %v503 = vsel %vm66, %v472, 0.0
    %504 = vadd.xlane.f32.xlu0 %v503
    %v505 = vpop.xlane.xlu0 %504
    %v506 = vsel %vm66, %v473, 0.0
    %507 = vadd.xlane.f32.xlu0 %v506
    %v508 = vpop.xlane.xlu0 %507
    %v509 = vsel %vm66, %v474, 0.0
    %510 = vadd.xlane.f32.xlu0 %v509
    %v511 = vpop.xlane.xlu0 %510
    %v512 = vsel %vm66, %v475, 0.0
    %513 = vadd.xlane.f32.xlu0 %v512
    %v514 = vpop.xlane.xlu0 %513
    %v515 = vsel %vm66, %v476, 0.0
    %516 = vadd.xlane.f32.xlu0 %v515
    %v517 = vpop.xlane.xlu0 %516
    %v518 = vsel %vm66, %v477, 0.0
    %519 = vadd.xlane.f32.xlu0 %v518
    %v520 = vpop.xlane.xlu0 %519
    %v521 = vsel %vm66, %v478, 0.0
    %522 = vadd.xlane.f32.xlu0 %v521
    %v523 = vpop.xlane.xlu0 %522
    %v524 = vsel %vm66, %v479, 0.0
    %525 = vadd.xlane.f32.xlu0 %v524
    %v526 = vpop.xlane.xlu0 %525
    %v527 = vsel %vm66, %v480, 0.0
    %528 = vadd.xlane.f32.xlu0 %v527
    %v529 = vpop.xlane.xlu0 %528
    %v530 = vsel %vm66, %v481, 0.0
    %531 = vadd.xlane.f32.xlu0 %v530
    %v532 = vpop.xlane.xlu0 %531
    %v533 = vsel %vm66, %v482, 0.0
    %534 = vadd.xlane.f32.xlu0 %v533
    %v535 = vpop.xlane.xlu0 %534
    %v536 = vsel %vm66, %v483, 0.0
    %537 = vadd.xlane.f32.xlu0 %v536
    %v538 = vpop.xlane.xlu0 %537
    %v539 = vsel %vm66, %v484, 0.0
    %540 = vadd.xlane.f32.xlu0 %v539
    %v541 = vpop.xlane.xlu0 %540
    %v542 = vsel %vm66, %v485, 0.0
    %543 = vadd.xlane.f32.xlu0 %v542
    %v544 = vpop.xlane.xlu0 %543
    %v545 = vsel %vm66, %v486, 0.0
    %546 = vadd.xlane.f32.xlu0 %v545
    %v547 = vpop.xlane.xlu0 %546
    %v548 = vsel %vm66, %v487, 0.0
    %549 = vadd.xlane.f32.xlu0 %v548
    %v550 = vpop.xlane.xlu0 %549
    %v551 = vsel %vm66, %v488, 0.0
    %552 = vadd.xlane.f32.xlu0 %v551
    %v553 = vpop.xlane.xlu0 %552
    %v554 = vsel %vm66, %v489, 0.0
    %555 = vadd.xlane.f32.xlu0 %v554
    %v556 = vpop.xlane.xlu0 %555
    %v557 = vsel %vm66, %v490, 0.0
    %558 = vadd.xlane.f32.xlu0 %v557
    %v559 = vpop.xlane.xlu0 %558
    %v560 = vsel %vm66, %v491, 0.0
    %561 = vadd.xlane.f32.xlu0 %v560
    %v562 = vpop.xlane.xlu0 %561
    %v563 = vsel %vm66, %v492, 0.0
    %564 = vadd.xlane.f32.xlu0 %v563
    %v565 = vpop.xlane.xlu0 %564
    %v566 = vsel %vm66, %v493, 0.0
    %567 = vadd.xlane.f32.xlu0 %v566
    %v568 = vpop.xlane.xlu0 %567
    %v570 = vlaneseq
    %v571 = vshrl.u32 %v570, 7
    %v572 = vsub.s32 0, %v571
    %v573 = vrot.slane %v65, %v572
    %v575 = vsel %vm444, %v573, 0.0
    %v576 = vsel %vm445, %v573, 0.0
    %v577 = vsel %vm446, %v573, 0.0
    %v578 = vsel %vm447, %v573, 0.0
    %v579 = vsel %vm448, %v573, 0.0
    %v580 = vsel %vm449, %v573, 0.0
    %v581 = vsel %vm450, %v573, 0.0
    %v582 = vsel %vm451, %v573, 0.0
    %v583 = vsel %vm452, %v573, 0.0
    %v584 = vsel %vm453, %v573, 0.0
    %v585 = vsel %vm454, %v573, 0.0
    %v586 = vsel %vm455, %v573, 0.0
    %v587 = vsel %vm456, %v573, 0.0
    %v588 = vsel %vm457, %v573, 0.0
    %v589 = vsel %vm458, %v573, 0.0
    %v590 = vsel %vm459, %v573, 0.0
    %v591 = vsel %vm460, %v573, 0.0
    %v592 = vsel %vm461, %v573, 0.0
    %v593 = vsel %vm462, %v573, 0.0
    %v594 = vsel %vm463, %v573, 0.0
    %v595 = vsel %vm464, %v573, 0.0
    %v596 = vsel %vm465, %v573, 0.0
    %v597 = vsel %vm466, %v573, 0.0
    %v598 = vsel %vm467, %v573, 0.0
    %v599 = vsel %vm468, %v573, 0.0
    %v600 = vsel %vm66, %v575, 0.0
    %601 = vadd.xlane.f32.xlu0 %v600
    %v602 = vpop.xlane.xlu0 %601
    %v603 = vsel %vm66, %v576, 0.0
    %604 = vadd.xlane.f32.xlu0 %v603
    %v605 = vpop.xlane.xlu0 %604
    %v606 = vsel %vm66, %v577, 0.0
    %607 = vadd.xlane.f32.xlu0 %v606
    %v608 = vpop.xlane.xlu0 %607
    %v609 = vsel %vm66, %v578, 0.0
    %610 = vadd.xlane.f32.xlu0 %v609
    %v611 = vpop.xlane.xlu0 %610
    %v612 = vsel %vm66, %v579, 0.0
    %613 = vadd.xlane.f32.xlu0 %v612
    %v614 = vpop.xlane.xlu0 %613
    %v615 = vsel %vm66, %v580, 0.0
    %616 = vadd.xlane.f32.xlu0 %v615
    %v617 = vpop.xlane.xlu0 %616
    %v618 = vsel %vm66, %v581, 0.0
    %619 = vadd.xlane.f32.xlu0 %v618
    %v620 = vpop.xlane.xlu0 %619
    %v621 = vsel %vm66, %v582, 0.0
    %622 = vadd.xlane.f32.xlu0 %v621
    %v623 = vpop.xlane.xlu0 %622
    %v624 = vsel %vm66, %v583, 0.0
    %625 = vadd.xlane.f32.xlu0 %v624
    %v626 = vpop.xlane.xlu0 %625
    %v627 = vsel %vm66, %v584, 0.0
    %628 = vadd.xlane.f32.xlu0 %v627
    %v629 = vpop.xlane.xlu0 %628
    %v630 = vsel %vm66, %v585, 0.0
    %631 = vadd.xlane.f32.xlu0 %v630
    %v632 = vpop.xlane.xlu0 %631
    %v633 = vsel %vm66, %v586, 0.0
    %634 = vadd.xlane.f32.xlu0 %v633
    %v635 = vpop.xlane.xlu0 %634
    %v636 = vsel %vm66, %v587, 0.0
    %637 = vadd.xlane.f32.xlu0 %v636
    %v638 = vpop.xlane.xlu0 %637
    %v639 = vsel %vm66, %v588, 0.0
    %640 = vadd.xlane.f32.xlu0 %v639
    %v641 = vpop.xlane.xlu0 %640
    %v642 = vsel %vm66, %v589, 0.0
    %643 = vadd.xlane.f32.xlu0 %v642
    %v644 = vpop.xlane.xlu0 %643
    %v645 = vsel %vm66, %v590, 0.0
    %646 = vadd.xlane.f32.xlu0 %v645
    %v647 = vpop.xlane.xlu0 %646
    %v648 = vsel %vm66, %v591, 0.0
    %649 = vadd.xlane.f32.xlu0 %v648
    %v650 = vpop.xlane.xlu0 %649
    %v651 = vsel %vm66, %v592, 0.0
    %652 = vadd.xlane.f32.xlu0 %v651
    %v653 = vpop.xlane.xlu0 %652
    %v654 = vsel %vm66, %v593, 0.0
    %655 = vadd.xlane.f32.xlu0 %v654
    %v656 = vpop.xlane.xlu0 %655
    %v657 = vsel %vm66, %v594, 0.0
    %658 = vadd.xlane.f32.xlu0 %v657
    %v659 = vpop.xlane.xlu0 %658
    %v660 = vsel %vm66, %v595, 0.0
    %661 = vadd.xlane.f32.xlu0 %v660
    %v662 = vpop.xlane.xlu0 %661
    %v663 = vsel %vm66, %v596, 0.0
    %664 = vadd.xlane.f32.xlu0 %v663
    %v665 = vpop.xlane.xlu0 %664
    %v666 = vsel %vm66, %v597, 0.0
    %667 = vadd.xlane.f32.xlu0 %v666
    %v668 = vpop.xlane.xlu0 %667
    %v669 = vsel %vm66, %v598, 0.0
    %670 = vadd.xlane.f32.xlu0 %v669
    %v671 = vpop.xlane.xlu0 %670
    %v672 = vsel %vm66, %v599, 0.0
    %673 = vadd.xlane.f32.xlu0 %v672
    %v674 = vpop.xlane.xlu0 %673
    %v675 = vsub.f32 %v342, %v496
    %v676 = vsub.f32 %v343, %v499
    %v677 = vsub.f32 %v344, %v502
    %v678 = vsub.f32 %v345, %v505
    %v679 = vsub.f32 %v346, %v508
    %v680 = vsub.f32 %v347, %v511
    %v681 = vsub.f32 %v348, %v514
    %v682 = vsub.f32 %v349, %v517
    %v683 = vsub.f32 %v350, %v520
    %v684 = vsub.f32 %v351, %v523
    %v685 = vsub.f32 %v352, %v526
    %v686 = vsub.f32 %v353, %v529
    %v687 = vsub.f32 %v354, %v532
    %v688 = vsub.f32 %v355, %v535
    %v689 = vsub.f32 %v356, %v538
    %v690 = vsub.f32 %v357, %v541
    %v691 = vsub.f32 %v358, %v544
    %v692 = vsub.f32 %v359, %v547
    %v693 = vsub.f32 %v360, %v550
    %v694 = vsub.f32 %v361, %v553
    %v695 = vsub.f32 %v362, %v556
    %v696 = vsub.f32 %v363, %v559
    %v697 = vsub.f32 %v364, %v562
    %v698 = vsub.f32 %v365, %v565
    %v699 = vsub.f32 %v366, %v568
    %v700 = vmul.f32 %v602, %v675
    %v701 = vmul.f32 %v605, %v676
    %v702 = vmul.f32 %v608, %v677
    %v703 = vmul.f32 %v611, %v678
    %v704 = vmul.f32 %v614, %v679
    %v705 = vmul.f32 %v617, %v680
    %v706 = vmul.f32 %v620, %v681
    %v707 = vmul.f32 %v623, %v682
    %v708 = vmul.f32 %v626, %v683
    %v709 = vmul.f32 %v629, %v684
    %v710 = vmul.f32 %v632, %v685
    %v711 = vmul.f32 %v635, %v686
    %v712 = vmul.f32 %v638, %v687
    %v713 = vmul.f32 %v641, %v688
    %v714 = vmul.f32 %v644, %v689
    %v715 = vmul.f32 %v647, %v690
    %v716 = vmul.f32 %v650, %v691
    %v717 = vmul.f32 %v653, %v692
    %v718 = vmul.f32 %v656, %v693
    %v719 = vmul.f32 %v659, %v694
    %v720 = vmul.f32 %v662, %v695
    %v721 = vmul.f32 %v665, %v696
    %v722 = vmul.f32 %v668, %v697
    %v723 = vmul.f32 %v671, %v698
    %v724 = vmul.f32 %v674, %v699
    %v725 = vsub.f32 0.0, %v700
    %v726 = vsub.f32 0.0, %v701
    %v727 = vsub.f32 0.0, %v702
    %v728 = vsub.f32 0.0, %v703
    %v729 = vsub.f32 0.0, %v704
    %v730 = vsub.f32 0.0, %v705
    %v731 = vsub.f32 0.0, %v706
    %v732 = vsub.f32 0.0, %v707
    %v733 = vsub.f32 0.0, %v708
    %v734 = vsub.f32 0.0, %v709
    %v735 = vsub.f32 0.0, %v710
    %v736 = vsub.f32 0.0, %v711
    %v737 = vsub.f32 0.0, %v712
    %v738 = vsub.f32 0.0, %v713
    %v739 = vsub.f32 0.0, %v714
    %v740 = vsub.f32 0.0, %v715
    %v741 = vsub.f32 0.0, %v716
    %v742 = vsub.f32 0.0, %v717
    %v743 = vsub.f32 0.0, %v718
    %v744 = vsub.f32 0.0, %v719
    %v745 = vsub.f32 0.0, %v720
    %v746 = vsub.f32 0.0, %v721
    %v747 = vsub.f32 0.0, %v722
    %v748 = vsub.f32 0.0, %v723
    %v749 = vsub.f32 0.0, %v724
    %v750 = vmul.f32 %v725, 1.442695
    %v751 = vpow.pop %v750
    %v752 = vmul.f32 %v726, 1.442695
    %v753 = vpow.pop %v752
    %v754 = vmul.f32 %v727, 1.442695
    %v755 = vpow.pop %v754
    %v756 = vmul.f32 %v728, 1.442695
    %v757 = vpow.pop %v756
    %v758 = vmul.f32 %v729, 1.442695
    %v759 = vpow.pop %v758
    %v760 = vmul.f32 %v730, 1.442695
    %v761 = vpow.pop %v760
    %v762 = vmul.f32 %v731, 1.442695
    %v763 = vpow.pop %v762
    %v764 = vmul.f32 %v732, 1.442695
    %v765 = vpow.pop %v764
    %v766 = vmul.f32 %v733, 1.442695
    %v767 = vpow.pop %v766
    %v768 = vmul.f32 %v734, 1.442695
    %v769 = vpow.pop %v768
    %v770 = vmul.f32 %v735, 1.442695
    %v771 = vpow.pop %v770
    %v772 = vmul.f32 %v736, 1.442695
    %v773 = vpow.pop %v772
    %v774 = vmul.f32 %v737, 1.442695
    %v775 = vpow.pop %v774
    %v776 = vmul.f32 %v738, 1.442695
    %v777 = vpow.pop %v776
    %v778 = vmul.f32 %v739, 1.442695
    %v779 = vpow.pop %v778
    %v780 = vmul.f32 %v740, 1.442695
    %v781 = vpow.pop %v780
    %v782 = vmul.f32 %v741, 1.442695
    %v783 = vpow.pop %v782
    %v784 = vmul.f32 %v742, 1.442695
    %v785 = vpow.pop %v784
    %v786 = vmul.f32 %v743, 1.442695
    %v787 = vpow.pop %v786
    %v788 = vmul.f32 %v744, 1.442695
    %v789 = vpow.pop %v788
    %v790 = vmul.f32 %v745, 1.442695
    %v791 = vpow.pop %v790
    %v792 = vmul.f32 %v746, 1.442695
    %v793 = vpow.pop %v792
    %v794 = vmul.f32 %v747, 1.442695
    %v795 = vpow.pop %v794
    %v796 = vmul.f32 %v748, 1.442695
    %v797 = vpow.pop %v796
    %v798 = vmul.f32 %v749, 1.442695
    %v799 = vpow.pop %v798
    %v800 = vsub.f32 1.0, %v751
    %v801 = vsub.f32 1.0, %v753
    %v802 = vsub.f32 1.0, %v755
    %v803 = vsub.f32 1.0, %v757
    %v804 = vsub.f32 1.0, %v759
    %v805 = vsub.f32 1.0, %v761
    %v806 = vsub.f32 1.0, %v763
    %v807 = vsub.f32 1.0, %v765
    %v808 = vsub.f32 1.0, %v767
    %v809 = vsub.f32 1.0, %v769
    %v810 = vsub.f32 1.0, %v771
    %v811 = vsub.f32 1.0, %v773
    %v812 = vsub.f32 1.0, %v775
    %v813 = vsub.f32 1.0, %v777
    %v814 = vsub.f32 1.0, %v779
    %v815 = vsub.f32 1.0, %v781
    %v816 = vsub.f32 1.0, %v783
    %v817 = vsub.f32 1.0, %v785
    %v818 = vsub.f32 1.0, %v787
    %v819 = vsub.f32 1.0, %v789
    %v820 = vsub.f32 1.0, %v791
    %v821 = vsub.f32 1.0, %v793
    %v822 = vsub.f32 1.0, %v795
    %v823 = vsub.f32 1.0, %v797
    %v824 = vsub.f32 1.0, %v799
    %v825 = vmax.f32 %v800, 0.0
    %v826 = vmax.f32 %v801, 0.0
    %v827 = vmax.f32 %v802, 0.0
    %v828 = vmax.f32 %v803, 0.0
    %v829 = vmax.f32 %v804, 0.0
    %v830 = vmax.f32 %v805, 0.0
    %v831 = vmax.f32 %v806, 0.0
    %v832 = vmax.f32 %v807, 0.0
    %v833 = vmax.f32 %v808, 0.0
    %v834 = vmax.f32 %v809, 0.0
    %v835 = vmax.f32 %v810, 0.0
    %v836 = vmax.f32 %v811, 0.0
    %v837 = vmax.f32 %v812, 0.0
    %v838 = vmax.f32 %v813, 0.0
    %v839 = vmax.f32 %v814, 0.0
    %v840 = vmax.f32 %v815, 0.0
    %v841 = vmax.f32 %v816, 0.0
    %v842 = vmax.f32 %v817, 0.0
    %v843 = vmax.f32 %v818, 0.0
    %v844 = vmax.f32 %v819, 0.0
    %v845 = vmax.f32 %v820, 0.0
    %v846 = vmax.f32 %v821, 0.0
    %v847 = vmax.f32 %v822, 0.0
    %v848 = vmax.f32 %v823, 0.0
    %v849 = vmax.f32 %v824, 0.0
    %v850 = vmul.f32 %v825, %v825
    %v851 = vmul.f32 %v826, %v826
    %v852 = vmul.f32 %v827, %v827
    %v853 = vmul.f32 %v828, %v828
    %v854 = vmul.f32 %v829, %v829
    %v855 = vmul.f32 %v830, %v830
    %v856 = vmul.f32 %v831, %v831
    %v857 = vmul.f32 %v832, %v832
    %v858 = vmul.f32 %v833, %v833
    %v859 = vmul.f32 %v834, %v834
    %v860 = vmul.f32 %v835, %v835
    %v861 = vmul.f32 %v836, %v836
    %v862 = vmul.f32 %v837, %v837
    %v863 = vmul.f32 %v838, %v838
    %v864 = vmul.f32 %v839, %v839
    %v865 = vmul.f32 %v840, %v840
    %v866 = vmul.f32 %v841, %v841
    %v867 = vmul.f32 %v842, %v842
    %v868 = vmul.f32 %v843, %v843
    %v869 = vmul.f32 %v844, %v844
    %v870 = vmul.f32 %v845, %v845
    %v871 = vmul.f32 %v846, %v846
    %v872 = vmul.f32 %v847, %v847
    %v873 = vmul.f32 %v848, %v848
    %v874 = vmul.f32 %v849, %v849
    %v875 = vmul.f32 %v850, %v700
    %v876 = vmul.f32 %v851, %v701
    %v877 = vmul.f32 %v852, %v702
    %v878 = vmul.f32 %v853, %v703
    %v879 = vmul.f32 %v854, %v704
    %v880 = vmul.f32 %v855, %v705
    %v881 = vmul.f32 %v856, %v706
    %v882 = vmul.f32 %v857, %v707
    %v883 = vmul.f32 %v858, %v708
    %v884 = vmul.f32 %v859, %v709
    %v885 = vmul.f32 %v860, %v710
    %v886 = vmul.f32 %v861, %v711
    %v887 = vmul.f32 %v862, %v712
    %v888 = vmul.f32 %v863, %v713
    %v889 = vmul.f32 %v864, %v714
    %v890 = vmul.f32 %v865, %v715
    %v891 = vmul.f32 %v866, %v716
    %v892 = vmul.f32 %v867, %v717
    %v893 = vmul.f32 %v868, %v718
    %v894 = vmul.f32 %v869, %v719
    %v895 = vmul.f32 %v870, %v720
    %v896 = vmul.f32 %v871, %v721
    %v897 = vmul.f32 %v872, %v722
    %v898 = vmul.f32 %v873, %v723
    %v899 = vmul.f32 %v874, %v724
    %vm900 = vcmask 7168
    %v901 = vsel %vm900, %v875, 0.0
    %v902 = vsel %vm900, %v876, 0.0
    %v903 = vadd.f32 %v901, %v902
    %v904 = vsel %vm900, %v877, 0.0
    %v905 = vadd.f32 %v903, %v904
    %v906 = vsel %vm900, %v878, 0.0
    %v907 = vadd.f32 %v905, %v906
    %v908 = vsel %vm900, %v879, 0.0
    %v909 = vadd.f32 %v907, %v908
    %v910 = vsel %vm900, %v880, 0.0
    %v911 = vadd.f32 %v909, %v910
    %v912 = vsel %vm900, %v881, 0.0
    %v913 = vadd.f32 %v911, %v912
    %v914 = vsel %vm900, %v882, 0.0
    %v915 = vadd.f32 %v913, %v914
    %v916 = vsel %vm900, %v883, 0.0
    %v917 = vadd.f32 %v915, %v916
    %v918 = vsel %vm900, %v884, 0.0
    %v919 = vadd.f32 %v917, %v918
    %v920 = vsel %vm900, %v885, 0.0
    %v921 = vadd.f32 %v919, %v920
    %v922 = vsel %vm900, %v886, 0.0
    %v923 = vadd.f32 %v921, %v922
    %v924 = vsel %vm900, %v887, 0.0
    %v925 = vadd.f32 %v923, %v924
    %v926 = vsel %vm900, %v888, 0.0
    %v927 = vadd.f32 %v925, %v926
    %v928 = vsel %vm900, %v889, 0.0
    %v929 = vadd.f32 %v927, %v928
    %v930 = vsel %vm900, %v890, 0.0
    %v931 = vadd.f32 %v929, %v930
    %v932 = vsel %vm900, %v891, 0.0
    %v933 = vadd.f32 %v931, %v932
    %v934 = vsel %vm900, %v892, 0.0
    %v935 = vadd.f32 %v933, %v934
    %v936 = vsel %vm900, %v893, 0.0
    %v937 = vadd.f32 %v935, %v936
    %v938 = vsel %vm900, %v894, 0.0
    %v939 = vadd.f32 %v937, %v938
    %v940 = vsel %vm900, %v895, 0.0
    %v941 = vadd.f32 %v939, %v940
    %v942 = vsel %vm900, %v896, 0.0
    %v943 = vadd.f32 %v941, %v942
    %v944 = vsel %vm900, %v897, 0.0
    %v945 = vadd.f32 %v943, %v944
    %v946 = vsel %vm900, %v898, 0.0
    %v947 = vadd.f32 %v945, %v946
    %v948 = vsel %vm900, %v899, 0.0
    %v949 = vadd.f32 %v947, %v948
    %950 = vadd.xlane.f32.xlu0 %v949
    %v951 = vpop.xlane.xlu0 %950
    %v952 = vrot.slane %v951, 4
    %v953 = vadd.f32 %v951, %v952
    %v954 = vrot.slane %v953, 2
    %v955 = vadd.f32 %v953, %v954
    %v956 = vrot.slane %v955, 1
    %v957 = vadd.f32 %v955, %v956
    %s958 = vtos %v957
    %s959 = scalar_lea.smem [#allocation2], 0
    %960 = sst [smem:[%s959]] %s958
    // Predicated region
    $region14: #{tpu_custom_call.1} parent=1 // pred_check
      _
    $region15: #{tpu_custom_call.1} parent=1 // pred_check_branch
      %962 = sbr.rel (0) target = $region17
    $region16: #{tpu_custom_call.1} parent=1 // pred_region
      %s964 = ssub.s32 16, 16
      %965 = vsyncadd [#allocation3], %s964
      %968 = dma.smem_to_hbm [#allocation2], 16, %s3, [#allocation3]
    $region17: #{tpu_custom_call.1} parent=1 // pred_fallthru
      _
    // Predicated region
    $region18: #{tpu_custom_call.1} parent=1 // pred_check
      _
    $region19: #{tpu_custom_call.1} parent=1 // pred_check_branch
      %970 = sbr.rel (0) target = $region21
    $region20: #{tpu_custom_call.1} parent=1 // pred_region
      %971 = dma.done [#allocation3], 16
    $region21: #{tpu_custom_call.1} parent=1 // pred_fallthru
      _
    %972 = sfence
    %973 = vsyncpa [#allocation3], 1

</llo_original>
